<compile_context>
chip_gen: v5e
topology: v5e:2x2
jax: 0.10.0
libtpu: 0.0.40
codegen_flags: <defaults>
</compile_context>

<pallas_src>
import jax
import jax.numpy as jnp
import numpy as np
from jax.experimental import pallas as pl
from jax.experimental.pallas import tpu as pltpu


# --------------------------------------------------------------------------- #
# Pool geometry / host-side constant construction
# --------------------------------------------------------------------------- #
def _pool_params(kernel_size):
    # Mirrors the PyTorch module exactly: any other kernel_size -> (1,1) pool, no pad.
    if kernel_size == 3:
        return 3, 1
    elif kernel_size == 5:
        return 5, 2
    elif kernel_size == 7:
        return 7, 3
    return 1, 0


def _build_pool_matrix(C_in, C_out, kernel_size, g):
    """Binary window-membership matrix (block-diagonal over the g folded batch
    rows) plus the precomputed 1/count row (count_include_pad=False divisors)."""
    k, p = _pool_params(kernel_size)
    stride = 2
    out_dim = (C_in + 2 * p - k) // stride + 1      # AvgPool2d output width
    n_out = max(out_dim, C_out)                     # F.pad with zeros when out_dim < C_out

    M1 = np.zeros((C_in, n_out), dtype=np.float32)
    inv1 = np.ones((1, n_out), dtype=np.float32)    # 1.0 on the zero-pad columns
    for j in range(out_dim):
        start = j * stride - p
        valid = [i for i in range(start, start + k) if 0 <= i < C_in]
        M1[valid, j] = 1.0
        inv1[0, j] = 1.0 / float(len(valid))        # count_include_pad=False divisor

    if g > 1:
        M = np.kron(np.eye(g, dtype=np.float32), M1)   # block-diagonal fold matrix
        inv = np.tile(inv1, (1, g))
    else:
        M, inv = M1, inv1
    return jnp.asarray(M), jnp.asarray(inv), n_out


# --------------------------------------------------------------------------- #
# Generation-aware VMEM budget and tile selection
# --------------------------------------------------------------------------- #
def _vmem_limit_bytes():
    cap = None
    try:
        cap = getattr(pltpu.get_tpu_info(), "vmem_capacity_bytes", None)
    except Exception:
        cap = None
    if not cap:
        cap = 64 * 1024 * 1024                      # conservative: v7x per-TC VMEM
    # v7x (64 MiB physical): stay <= ~48 MiB; v5e/v6e (128 MiB): 64 MiB is plenty.
    return (48 if cap <= 64 * 1024 * 1024 else 64) * 1024 * 1024


def _round_up(x, m):
    return ((x + m - 1) // m) * m


def _choose_tiling(Nf, C_eff, n_out_eff, itemsize, vmem_limit):
    budget = vmem_limit - (4 << 20)                 # headroom for compiler scratch

    def max_tile_n(k_block, with_acc):
        # Resident M / inv-count counted double-buffered (constant index_map, but
        # the pipeline may still allocate two copies) -- addresses the v7x concern.
        fixed = 2 * k_block * n_out_eff * 4 + 2 * n_out_eff * 4
        per_row = 2 * k_block * itemsize + 2 * n_out_eff * itemsize
        if with_acc:
            per_row += n_out_eff * 4                # f32 accumulator scratch
        avail = budget - fixed
        if avail <= 0:
            return 0
        return (avail // per_row) // 8 * 8

    tile_k, k_tiles = C_eff, 1
    tile_n = max_tile_n(C_eff, with_acc=False)
    if tile_n < 8 and C_eff % 128 == 0 and C_eff > 128:
        # Very large C_in: K-tile the contraction so M streams in 128-aligned slabs.
        tile_k = 128
        for cand in range(C_eff - 128, 127, -128):
            if C_eff % cand == 0 and 2 * cand * n_out_eff * 4 <= budget // 2:
                tile_k = cand
                break
        k_tiles = C_eff // tile_k
        tile_n = max_tile_n(tile_k, with_acc=True)

    if Nf < 8:
        tile_n = Nf                                 # block == full batch dim (legal)
    else:
        tile_n = max(8, min(tile_n, 2048, _round_up(Nf, 8)))
        # v7x megacore: keep >= 2 batch tiles so both TensorCores get work.
        if tile_n >= Nf and Nf >= 16:
            tile_n = _round_up(-(-Nf // 2), 8)
    return tile_n, tile_k, k_tiles


# --------------------------------------------------------------------------- #
# Kernels
# --------------------------------------------------------------------------- #
def _avgpool_kernel(x_ref, m_ref, inv_ref, o_ref):
    # Window sums on the MXU with an exact 0/1 matrix, then a VPU scale by the
    # precomputed 1/count row.
    acc = jnp.dot(x_ref[...], m_ref[...], preferred_element_type=jnp.float32)
    o_ref[...] = (acc * inv_ref[...]).astype(o_ref.dtype)


def _avgpool_kernel_ktiled(x_ref, m_ref, inv_ref, o_ref, acc_ref):
    k = pl.program_id(1)

    @pl.when(k == 0)
    def _():
        acc_ref[...] = jnp.zeros_like(acc_ref)

    acc_ref[...] += jnp.dot(x_ref[...], m_ref[...],
                            preferred_element_type=jnp.float32)

    @pl.when(k == pl.num_programs(1) - 1)
    def _():
        o_ref[...] = (acc_ref[...] * inv_ref[...]).astype(o_ref.dtype)


# --------------------------------------------------------------------------- #
# Wrapper
# --------------------------------------------------------------------------- #
def avg_pooling_forward(x, C_out, kernel_size):
    N, C_in = x.shape

    # Lane folding: with tiny C_in each vreg row would use only C_in of 128 lanes.
    # Fold g batch rows into the lane axis (free, contiguous reshape); g must
    # divide N so no host-side batch pad is ever needed.
    g = 1
    if C_in < 128 and N > 1:
        g_max = max(1, 128 // C_in)
        for cand in range(min(g_max, N), 1, -1):
            if N % cand == 0:
                g = cand
                break

    M, inv_cnt, n_out = _build_pool_matrix(C_in, C_out, kernel_size, g)
    Nf, C_eff, n_out_eff = N // g, g * C_in, g * n_out
    x_f = x.reshape(Nf, C_eff) if g > 1 else x

    vmem_limit = _vmem_limit_bytes()
    tile_n, tile_k, k_tiles = _choose_tiling(
        Nf, C_eff, n_out_eff, x.dtype.itemsize, vmem_limit)

    n_tiles = pl.cdiv(Nf, tile_n)   # ragged last block: OOB rows read-but-dropped

    if k_tiles == 1:
        grid_spec = pltpu.PrefetchScalarGridSpec(
            num_scalar_prefetch=0,
            grid=(n_tiles,),
            in_specs=[
                pl.BlockSpec((tile_n, C_eff), lambda i: (i, 0)),      # streamed x tiles
                pl.BlockSpec((C_eff, n_out_eff), lambda i: (0, 0)),   # resident M
                pl.BlockSpec((1, n_out_eff), lambda i: (0, 0)),       # resident 1/count
            ],
            out_specs=pl.BlockSpec((tile_n, n_out_eff), lambda i: (i, 0)),
        )
        kernel = _avgpool_kernel
        dims = ("parallel",)
    else:
        grid_spec = pltpu.PrefetchScalarGridSpec(
            num_scalar_prefetch=0,
            grid=(n_tiles, k_tiles),
            in_specs=[
                pl.BlockSpec((tile_n, tile_k), lambda i, k: (i, k)),
                pl.BlockSpec((tile_k, n_out_eff), lambda i, k: (k, 0)),
                pl.BlockSpec((1, n_out_eff), lambda i, k: (0, 0)),
            ],
            out_specs=pl.BlockSpec((tile_n, n_out_eff), lambda i, k: (i, 0)),
            scratch_shapes=[pltpu.VMEM((tile_n, n_out_eff), jnp.float32)],
        )
        kernel = _avgpool_kernel_ktiled
        dims = ("parallel", "arbitrary")

    out = pl.pallas_call(
        kernel,
        out_shape=jax.ShapeDtypeStruct((Nf, n_out_eff), x.dtype),
        grid_spec=grid_spec,
        compiler_params=pltpu.CompilerParams(
            dimension_semantics=dims,
            vmem_limit_bytes=vmem_limit,
        ),
    )(x_f, M, inv_cnt)

    # Unfold + back to the module's output layout (N, channels, 1, 1).
    # Both reshapes are contiguous (free) -- no host-side pad or slice anywhere.
    return out.reshape(N, n_out, 1, 1)


# --------------------------------------------------------------------------- #
# Pure-numpy reference (matches the PyTorch module)
# --------------------------------------------------------------------------- #
def _numpy_reference(x, C_out, kernel_size):
    x = np.asarray(x)
    N, C_in = x.shape
    k, p = _pool_params(kernel_size)
    stride = 2
    out_dim = (C_in + 2 * p - k) // stride + 1
    y = np.zeros((N, out_dim), dtype=np.float32)
    for j in range(out_dim):
        start = j * stride - p
        valid = [i for i in range(start, start + k) if 0 <= i < C_in]
        y[:, j] = x[:, valid].sum(axis=1) / float(len(valid))
    if out_dim < C_out:
        y = np.concatenate([y, np.zeros((N, C_out - out_dim), np.float32)], axis=1)
    return y.reshape(N, -1, 1, 1)


if __name__ == "__main__":
    # Deterministic small example: batch=64, C_in=16, C_out=12, kernel_size=3.
    # (C_in=16 exercises the lane-folding path: g=8 -> a lane-dense (8,128) tile.)
    N, C_in, C_out, kernel_size = 64, 16, 12, 3
    key = jax.random.PRNGKey(0)
    x = jax.random.normal(key, (N, C_in), dtype=jnp.float32)

    y = avg_pooling_forward(x, C_out, kernel_size)
    y = jax.block_until_ready(y)

    ref = _numpy_reference(x, C_out, kernel_size)
    assert y.shape == ref.shape, (y.shape, ref.shape)
    np.testing.assert_allclose(np.asarray(y), ref, rtol=1e-5, atol=1e-5)

    print("KERNEL_OK")
</pallas_src>

<mosaic_0001>
module attributes {stable_mosaic.version = 11 : i64} {
  func.func @_avgpool_kernel(%arg0: i32, %arg1: memref<8x128xf32, #tpu.memory_space<vmem>>, %arg2: memref<128x96xf32, #tpu.memory_space<vmem>>, %arg3: memref<1x96xf32, #tpu.memory_space<vmem>>, %arg4: memref<8x96xf32, #tpu.memory_space<vmem>>) attributes {dimension_semantics = [#tpu.dimension_semantics<parallel>], iteration_bounds = array<i64: 1>, scalar_prefetch = 0 : i64, scratch_operands = 0 : i64, tpu.core_type = #tpu.core_type<tc>, window_params = [{transform_indices = @transform_0, window_bounds = array<i64: 8, 128>}, {pipeline_mode = #tpu.pipeline_mode<synchronous>, transform_indices = @transform_1, window_bounds = array<i64: 128, 96>}, {pipeline_mode = #tpu.pipeline_mode<synchronous>, transform_indices = @transform_2, window_bounds = array<i64: 1, 96>}, {transform_indices = @transform_3, window_bounds = array<i64: 8, 96>}]} {
    %c0 = arith.constant 0 : index
    %c0_0 = arith.constant 0 : index
    %0 = vector.load %arg1[%c0, %c0_0] : memref<8x128xf32, #tpu.memory_space<vmem>>, vector<8x128xf32>
    %c0_1 = arith.constant 0 : index
    %c0_2 = arith.constant 0 : index
    %1 = vector.load %arg2[%c0_1, %c0_2] : memref<128x96xf32, #tpu.memory_space<vmem>>, vector<128x96xf32>
    %cst = arith.constant dense<0.000000e+00> : vector<8x96xf32>
    %2 = tpu.matmul %0, %1, %cst {dimension_numbers = #tpu.dot_dimension_numbers<[1], [0], [0], [1], [0, 0, 1, 1], [], []>} : vector<8x128xf32>, vector<128x96xf32>, vector<8x96xf32> -> vector<8x96xf32>
    %c0_3 = arith.constant 0 : index
    %c0_4 = arith.constant 0 : index
    %3 = vector.load %arg3[%c0_3, %c0_4] : memref<1x96xf32, #tpu.memory_space<vmem>>, vector<1x96xf32>
    %4 = vector.broadcast %3 : vector<1x96xf32> to vector<8x96xf32>
    %5 = arith.mulf %2, %4 : vector<8x96xf32>
    %c0_5 = arith.constant 0 : index
    %c0_6 = arith.constant 0 : index
    %6 = vector.load %arg4[%c0_5, %c0_6] : memref<8x96xf32, #tpu.memory_space<vmem>>, vector<8x96xf32>
    tpu.vector_store %arg4[%c0_5, %c0_6], %5 {strides = array<i32>} : memref<8x96xf32, #tpu.memory_space<vmem>>, vector<8x96xf32>,
    return
  }
  func.func @transform_0(%arg0: i32) -> (i32, i32) {
    %c0_i32 = arith.constant 0 : i32
    %c0_i32_0 = arith.constant 0 : i32
    return %arg0, %c0_i32 : i32, i32
  }
  func.func @transform_1(%arg0: i32) -> (i32, i32) {
    %c0_i32 = arith.constant 0 : i32
    %c0_i32_0 = arith.constant 0 : i32
    %c0_i32_1 = arith.constant 0 : i32
    return %c0_i32, %c0_i32_0 : i32, i32
  }
  func.func @transform_2(%arg0: i32) -> (i32, i32) {
    %c0_i32 = arith.constant 0 : i32
    %c0_i32_0 = arith.constant 0 : i32
    %c0_i32_1 = arith.constant 0 : i32
    return %c0_i32, %c0_i32_0 : i32, i32
  }
  func.func @transform_3(%arg0: i32) -> (i32, i32) {
    %c0_i32 = arith.constant 0 : i32
    %c0_i32_0 = arith.constant 0 : i32
    return %arg0, %c0_i32 : i32, i32
  }
}

</mosaic_0001>

<llo_original>
// kernel: tpu_custom_call.1
$region0: #{tpu_custom_call.1}
  #allocation0 [shape = 'u32[]', space=smem, size = 0x4, offset = 0x4, fixed_abs, tag = 'smem constant byte address 0x4 - core index']
  #allocation1 [shape = 'u32[72,128]{1,0:T(1,128)}', space=vmem, size = 0x9000, scoped, tag = 'internal scratch']
  %s0 = inlined_call_operand.vmem [shape: f32[8,128], index: 0, kind: input, shape index: {}]
  %s1 = inlined_call_operand.vmem [shape: f32[128,96], index: 1, kind: input, shape index: {}]
  %s2 = inlined_call_operand.vmem [shape: f32[1,96], index: 2, kind: input, shape index: {}]
  %s3 = inlined_call_operand.hbm [shape: f32[8,96], index: 3, kind: output, shape index: {}]
  %s4 = sld [smem:[#allocation0]]
  $region22: #{tpu_custom_call.1} parent=0
    _
  %s6 = ssub.s32 1, %s4
  %s7 = scalar_select 0, %s6, %s4
  $region1: #{tpu_custom_call.1} parent=0
    #allocation2 [shape = 'u8[4096]{0}', space=vmem, size = 0x1000, scoped, tag = 'output window, operand 0, single buffered']
    #allocation3 [shape = 's32[1]{0}', space=sflag, size = 0x4, scoped, tag = 'scoped memory for tpu_custom_call.1']
    %8 = vsyncpa [#allocation3], 0
    // Predicated region
    $region2: #{tpu_custom_call.1} parent=1 // pred_check
      _
    $region3: #{tpu_custom_call.1} parent=1 // pred_check_branch
      %10 = sbr.rel (0) target = $region5
    $region4: #{tpu_custom_call.1} parent=1 // pred_region
      _
    $region5: #{tpu_custom_call.1} parent=1 // pred_fallthru
      _
    // Predicated region
    $region6: #{tpu_custom_call.1} parent=1 // pred_check
      _
    $region7: #{tpu_custom_call.1} parent=1 // pred_check_branch
      %12 = sbr.rel (0) target = $region9
    $region8: #{tpu_custom_call.1} parent=1 // pred_region
      _
    $region9: #{tpu_custom_call.1} parent=1 // pred_fallthru
      _
    // Predicated region
    $region10: #{tpu_custom_call.1} parent=1 // pred_check
      _
    $region11: #{tpu_custom_call.1} parent=1 // pred_check_branch
      %14 = sbr.rel (0) target = $region13
    $region12: #{tpu_custom_call.1} parent=1 // pred_region
      _
    $region13: #{tpu_custom_call.1} parent=1 // pred_fallthru
      _
    %v15 = vld [vmem:[%s0] sm:$0xff]
    %v16 = vld [vmem:[%s1] sm:$0xff]
    %v17 = vld [vmem:[%s1 + $0x8] sm:$0xff]
    %v18 = vld [vmem:[%s1 + $0x10] sm:$0xff]
    %v19 = vld [vmem:[%s1 + $0x18] sm:$0xff]
    %v20 = vld [vmem:[%s1 + $0x20] sm:$0xff]
    %v21 = vld [vmem:[%s1 + $0x28] sm:$0xff]
    %v22 = vld [vmem:[%s1 + $0x30] sm:$0xff]
    %v23 = vld [vmem:[%s1 + $0x38] sm:$0xff]
    %v24 = vld [vmem:[%s1 + $0x40] sm:$0xff]
    %v25 = vld [vmem:[%s1 + $0x48] sm:$0xff]
    %v26 = vld [vmem:[%s1 + $0x50] sm:$0xff]
    %v27 = vld [vmem:[%s1 + $0x58] sm:$0xff]
    %v28 = vld [vmem:[%s1 + $0x60] sm:$0xff]
    %v29 = vld [vmem:[%s1 + $0x68] sm:$0xff]
    %v30 = vld [vmem:[%s1 + $0x70] sm:$0xff]
    %v31 = vld [vmem:[%s1 + $0x78] sm:$0xff]
    %32 = vmatpush.msra.mxu0 %v31
    %33 = vmatpush.msra.mxu0 %v30
    %34 = vmatpush.msra.mxu0 %v29
    %35 = vmatpush.msra.mxu0 %v28
    %36 = vmatpush.msra.mxu0 %v27
    %37 = vmatpush.msra.mxu0 %v26
    %38 = vmatpush.msra.mxu0 %v25
    %39 = vmatpush.msra.mxu0 %v24
    %40 = vmatpush.msra.mxu0 %v23
    %41 = vmatpush.msra.mxu0 %v22
    %42 = vmatpush.msra.mxu0 %v21
    %43 = vmatpush.msra.mxu0 %v20
    %44 = vmatpush.msra.mxu0 %v19
    %45 = vmatpush.msra.mxu0 %v18
    %46 = vmatpush.msra.mxu0 %v17
    %47 = vmatpush.msra.mxu0 %v16
    %48 = vmatmul.f32.gmra.mxu0 %v15
    %v49 = vpop.f32.mrf.mxu0
    %v50 = vadd.f32 0.0, %v49
    %51 = vdwg.mxu0
    %v52 = vld [vmem:[%s2] sm:$0x1]
    %v54 = vperm.slane %v52, 0
    %v56 = vmul.f32 %v50, %v54
    %vm57 = vcmask 785408
    %58 = vst.msk [vmem:[#allocation2] sm:$0xff] %vm57, %v56
    // Predicated region
    $region14: #{tpu_custom_call.1} parent=1 // pred_check
      _
    $region15: #{tpu_custom_call.1} parent=1 // pred_check_branch
      %60 = sbr.rel (0) target = $region17
    $region16: #{tpu_custom_call.1} parent=1 // pred_region
      %62 = vsyncadd [#allocation3], 0
      %s64 = sshll.u32 [#allocation2], 4
      %s65 = int_to_ptr.vmem [resolvable:$true] %s64
      %s66 = sshll.u32 %s3, 4
      %s67 = int_to_ptr.hbm [resolvable:$true] %s66
      %69 = dma.vmem_to_hbm [thread:$0]  %s65, 128, %s67, [#allocation3]
    $region17: #{tpu_custom_call.1} parent=1 // pred_fallthru
      _
    // Predicated region
    $region18: #{tpu_custom_call.1} parent=1 // pred_check
      _
    $region19: #{tpu_custom_call.1} parent=1 // pred_check_branch
      %71 = sbr.rel (0) target = $region21
    $region20: #{tpu_custom_call.1} parent=1 // pred_region
      %73 = dma.done [#allocation3], 128
    $region21: #{tpu_custom_call.1} parent=1 // pred_fallthru
      _
    %74 = vsyncpa [#allocation3], 1

</llo_original>
